<compile_context>
chip_gen: v7x
topology: tpu7x:2x2x1
jax: 0.10.0
libtpu: 0.0.40
codegen_flags: <defaults>
</compile_context>

<pallas_src>
import functools

import numpy as np
import jax
import jax.numpy as jnp
from jax.experimental import pallas as pl
from jax.experimental.pallas import tpu as pltpu


def _round_up(a, b):
    return (a + b - 1) // b * b


# ---------------------------------------------------------------------------
# Kernel: one MXU matmul per (column-tile, row-tile) grid cell.
# ---------------------------------------------------------------------------
def sr_fft_kernel(x_ref, w_ref, o_ref):
    """x:(TR,N) f32, w:(N,TN) bf16, o:(TR,TN) f32 — cast-in-kernel + MXU matmul."""
    x_bf = x_ref[...].astype(jnp.bfloat16)          # free: VPU slack, MXU-bound kernel
    o_ref[...] = jnp.dot(x_bf, w_ref[...], preferred_element_type=jnp.float32)


# ---------------------------------------------------------------------------
# Fused (masked rfft -> truncate -> irfft) operator, built once per param set.
# ---------------------------------------------------------------------------
@functools.lru_cache(maxsize=None)
def _get_weight(N, r_masking, init_freq, smooth, factor):
    F_bins = N // 2 + 1
    # rfftfreq(N, 1/init_freq) = j * init_freq / N, j = 0..N//2
    w_space = np.arange(F_bins, dtype=np.float64) * (init_freq / N)
    mask = np.clip((factor * r_masking - w_space) / smooth, 0.0, 1.0)

    # truncation: same expression as the module (== int(r_masking * F_bins))
    k = int(factor * r_masking / factor * F_bins)
    M = 2 * (k - 1)
    # TODO(synk): hand-built irfft assumes even output length M=2*(k-1); the
    # r_masking<1 truncated-spectrum path follows numpy semantics but is untested.

    n = np.arange(N, dtype=np.float64)[:, None]
    j = np.arange(k, dtype=np.float64)[None, :]
    # forward real DFT (first k bins) with the frequency mask folded in
    C_mat = np.cos(2.0 * np.pi * n * j / N) * mask[:k]      # (N, k)
    S_mat = -np.sin(2.0 * np.pi * n * j / N) * mask[:k]     # (N, k)

    # inverse real DFT (k Hermitian-extended bins -> length-M time signal)
    w = np.full((k,), 2.0)
    w[0] = 1.0
    w[-1] = 1.0
    jj = np.arange(k, dtype=np.float64)[:, None]
    mm = np.arange(M, dtype=np.float64)[None, :]
    A_mat = (w[:, None] / M) * np.cos(2.0 * np.pi * jj * mm / M)     # (k, M)
    B_mat = -(w[:, None] / M) * np.sin(2.0 * np.pi * jj * mm / M)    # (k, M)

    W = C_mat @ A_mat + S_mat @ B_mat                         # (N, M) float64

    M_pad = _round_up(M, 128)                                 # lane-dense output stores
    W_pad = np.zeros((N, M_pad), dtype=np.float32)
    W_pad[:, :M] = W.astype(np.float32)
    # TODO(synk): bf16 W validated at small N; for very large N keep f32 W or a
    # hi/lo split-bf16 W if the cos/sin cancellation error exceeds tolerance.
    W_dev = jnp.asarray(W_pad, dtype=jnp.bfloat16)            # one-time device constant
    return W_dev, M, M_pad


def _hw_params():
    """(row-tile cap, per-core VMEM capacity bytes) with safe fallbacks."""
    try:
        kind = jax.devices()[0].device_kind.lower()
    except Exception:
        kind = ""
    # 128-row tiles already fill a 128x128 MXU (v3/v4/v5); 256 for v6e/v7x.
    cap = 128 if ("v5" in kind or "v4" in kind or "v3" in kind) else 256
    try:
        vmem = int(pltpu.get_tpu_info().vmem_capacity_bytes)
    except Exception:
        vmem = 64 << 20                                        # v7x-safe fallback
    return cap, vmem


def sampling_rate_fft(x, r_masking=1.0, init_freq=16000.0, smooth=100.0,
                      factor=8000.0):
    """Pallas implementation of SamplingRateFFT.forward for x of shape (B, C, N)."""
    B, Cc, N = x.shape
    W_dev, M, M_pad = _get_weight(int(N), float(r_masking), float(init_freq),
                                  float(smooth), float(factor))

    R = B * Cc
    tr_cap, vmem_cap = _hw_params()

    # Row tile: multiple of 16 (bf16 sublane packing); ensure >=2 tiles when
    # R > 128 so the parallel row axis shards across both TensorCores on v7x.
    TR = min(tr_cap, _round_up(R, 16))
    n_row = pl.cdiv(R, TR)
    if n_row == 1 and R > 128:
        TR = _round_up((R + 1) // 2, 16)
        n_row = pl.cdiv(R, TR)

    # Column tiling: keep W fully resident + single-buffered if it fits the
    # per-core budget; otherwise tile output columns (W then double-buffered,
    # constant along the inner row axis -> streamed from HBM exactly once).
    budget = int(vmem_cap * 0.7)
    x_bufs = 2 * TR * N * 4 + TR * N * 2         # f32 double-buffer + in-kernel bf16 tmp
    if x_bufs + N * M_pad * 2 + 2 * TR * M_pad * 4 <= budget:
        TN, n_col = M_pad, 1
        w_spec = pl.BlockSpec((N, TN), lambda j, i: (0, j),
                              pipeline_mode=pl.Buffered(1))   # resident: no 2nd buffer
        w_bufs = N * TN * 2
    else:
        denom = 2 * N * 2 + 2 * TR * 4           # per output column: W + out double-buffers
        TN = max(256, min(M_pad, ((budget - x_bufs) // denom) // 256 * 256))
        n_col = pl.cdiv(M_pad, TN)
        w_spec = pl.BlockSpec((N, TN), lambda j, i: (0, j))
        w_bufs = 2 * N * TN * 2

    out_bufs = 2 * TR * TN * 4
    vmem_limit = min(vmem_cap,
                     max(32 << 20, int(1.5 * (x_bufs + w_bufs + out_bufs)) + (2 << 20)))

    # Free reshape; no pad / cast pass over x in HBM (cast happens in-kernel).
    xr = jnp.asarray(x, jnp.float32).reshape(R, N)

    flops = 2 * R * N * M_pad
    bytes_accessed = n_col * R * N * 4 + N * M_pad * 2 + R * M_pad * 4

    out = pl.pallas_call(
        sr_fft_kernel,
        out_shape=jax.ShapeDtypeStruct((R, M_pad), jnp.float32),
        grid=(n_col, n_row),                                  # rows innermost: W stays put
        in_specs=[
            pl.BlockSpec((TR, N), lambda j, i: (i, 0)),       # ragged last row tile OK
            w_spec,
        ],
        out_specs=pl.BlockSpec((TR, TN), lambda j, i: (i, j)),
        compiler_params=pltpu.CompilerParams(
            dimension_semantics=("parallel", "parallel"),
            vmem_limit_bytes=int(vmem_limit)),
        cost_estimate=pl.CostEstimate(flops=flops, transcendentals=0,
                                      bytes_accessed=bytes_accessed),
    )(xr, W_dev)

    return out[:, :M].reshape(B, Cc, M)


def reference(x, r_masking=1.0, init_freq=16000.0, smooth=100.0, factor=8000.0):
    """Pure-JAX reference mirroring the PyTorch forward."""
    N = x.shape[-1]
    F_bins = N // 2 + 1
    w_space = jnp.arange(F_bins, dtype=jnp.float32) * (init_freq / N)
    mask = jnp.clip((factor * r_masking - w_space) / smooth, 0.0, 1.0)
    fs = jnp.fft.rfft(x.astype(jnp.float32)) * mask
    k = int(factor * r_masking / factor * F_bins)
    fs = fs[:, :, :k]
    return jnp.fft.irfft(fs).astype(jnp.float32)


if __name__ == "__main__":
    key = jax.random.PRNGKey(0)
    B, C, N = 2, 4, 16
    x = jax.random.normal(key, (B, C, N), dtype=jnp.float32)

    # deterministic parameter init, exactly as in the module: r_masking = 1.0
    r_masking = 1.0

    y = jax.block_until_ready(sampling_rate_fft(x, r_masking=r_masking))
    y_ref = jax.block_until_ready(reference(x, r_masking=r_masking))

    np.testing.assert_allclose(np.asarray(y), np.asarray(y_ref),
                               rtol=2e-2, atol=2e-2)
    print("KERNEL_OK")
</pallas_src>

<mosaic_0001>
module attributes {stable_mosaic.version = 11 : i64} {
  func.func @sr_fft_kernel(%arg0: i32, %arg1: i32, %arg2: memref<16x16xf32, #tpu.memory_space<vmem>>, %arg3: memref<16x128xbf16, #tpu.memory_space<vmem>>, %arg4: memref<16x128xf32, #tpu.memory_space<vmem>>) attributes {dimension_semantics = [#tpu.dimension_semantics<parallel>, #tpu.dimension_semantics<parallel>], iteration_bounds = array<i64: 1, 1>, scalar_prefetch = 0 : i64, scratch_operands = 0 : i64, tpu.core_type = #tpu.core_type<tc>, window_params = [{transform_indices = @transform_0, window_bounds = array<i64: 16, 16>}, {pipeline_mode = #tpu.pipeline_mode<synchronous>, transform_indices = @transform_1, window_bounds = array<i64: 16, 128>}, {transform_indices = @transform_2, window_bounds = array<i64: 16, 128>}]} {
    %c0 = arith.constant 0 : index
    %c0_0 = arith.constant 0 : index
    %0 = vector.load %arg2[%c0, %c0_0] : memref<16x16xf32, #tpu.memory_space<vmem>>, vector<16x16xf32>
    %1 = arith.truncf %0 : vector<16x16xf32> to vector<16x16xbf16>
    %c0_1 = arith.constant 0 : index
    %c0_2 = arith.constant 0 : index
    %2 = vector.load %arg3[%c0_1, %c0_2] : memref<16x128xbf16, #tpu.memory_space<vmem>>, vector<16x128xbf16>
    %cst = arith.constant dense<0.000000e+00> : vector<16x128xf32>
    %3 = tpu.matmul %1, %2, %cst {dimension_numbers = #tpu.dot_dimension_numbers<[1], [0], [0], [1], [0, 0, 1, 1], [], []>} : vector<16x16xbf16>, vector<16x128xbf16>, vector<16x128xf32> -> vector<16x128xf32>
    %c0_3 = arith.constant 0 : index
    %c0_4 = arith.constant 0 : index
    %4 = vector.load %arg4[%c0_3, %c0_4] : memref<16x128xf32, #tpu.memory_space<vmem>>, vector<16x128xf32>
    tpu.vector_store %arg4[%c0_3, %c0_4], %3 {strides = array<i32>} : memref<16x128xf32, #tpu.memory_space<vmem>>, vector<16x128xf32>,
    return
  }
  func.func @transform_0(%arg0: i32, %arg1: i32) -> (i32, i32) {
    %c0_i32 = arith.constant 0 : i32
    %c0_i32_0 = arith.constant 0 : i32
    return %arg1, %c0_i32 : i32, i32
  }
  func.func @transform_1(%arg0: i32, %arg1: i32) -> (i32, i32) {
    %c0_i32 = arith.constant 0 : i32
    %c0_i32_0 = arith.constant 0 : i32
    return %c0_i32, %arg0 : i32, i32
  }
  func.func @transform_2(%arg0: i32, %arg1: i32) -> (i32, i32) {
    %c0_i32 = arith.constant 0 : i32
    return %arg1, %arg0 : i32, i32
  }
}

</mosaic_0001>

<llo_original>
// kernel: tpu_custom_call.1
$region0: #{tpu_custom_call.1}
  #allocation0 [shape = 'u32[]', space=smem, size = 0x4, offset = 0x4, fixed_abs, tag = 'smem constant byte address 0x4 - core index']
  #allocation1 [shape = 'u32[144,128]{1,0:T(1,128)}', space=vmem, size = 0x12000, scoped, tag = 'internal scratch']
  %s0 = inlined_call_operand.hbm [shape: f32[8,16], index: 0, kind: input, shape index: {}]
  %s1 = inlined_call_operand.hbm [shape: bf16[16,128], index: 1, kind: input, shape index: {}]
  %s2 = inlined_call_operand.hbm [shape: f32[8,128], index: 2, kind: output, shape index: {}]
  %s3 = sld [smem:[#allocation0]]
  $region26: #{tpu_custom_call.1} parent=0
    _
  %s5 = ssub.s32 1, %s3
  %s6 = scalar_select 0, %s5, %s3
  $region1: #{tpu_custom_call.1} parent=0
    #allocation2 [shape = 'u8[8192]{0}', space=vmem, size = 0x2000, scoped, tag = 'input window, operand 0, single buffered']
    #allocation3 [shape = 's32[1]{0}', space=sflag, size = 0x4, scoped, tag = 'scoped memory for tpu_custom_call.1']
    #allocation4 [shape = 's32[1]{0}', space=sflag, size = 0x4, scoped, tag = 'scoped memory for tpu_custom_call.1']
    #allocation5 [shape = 'u8[4096]{0}', space=vmem, size = 0x1000, scoped, tag = 'input window, operand 1, single buffered']
    #allocation6 [shape = 's32[1]{0}', space=sflag, size = 0x4, scoped, tag = 'scoped memory for tpu_custom_call.1']
    #allocation7 [shape = 'u8[8192]{0}', space=vmem, size = 0x2000, scoped, tag = 'output window, operand 0, single buffered']
    %7 = vsyncpa [#allocation3], 0
    %8 = vsyncpa [#allocation6], 0
    %9 = vsyncpa [#allocation4], 0
    // Predicated region
    $region2: #{tpu_custom_call.1} parent=1 // pred_check
      _
    $region3: #{tpu_custom_call.1} parent=1 // pred_check_branch
      %11 = sbr.rel (0) target = $region5
    $region4: #{tpu_custom_call.1} parent=1 // pred_region
      %s13 = ssub.s32 256, 128
      %14 = vsyncadd [#allocation3], %s13
      %s15 = sshll.u32 [#allocation2], 4
      %s16 = int_to_ptr.vmem [resolvable:$true] %s15
      %21 = dma.hbm_to_vmem [thread:$0]  %s0, 128, %s16, [#allocation3], 128, 128, 8
    $region5: #{tpu_custom_call.1} parent=1 // pred_fallthru
      _
    // Predicated region
    $region6: #{tpu_custom_call.1} parent=1 // pred_check
      _
    $region7: #{tpu_custom_call.1} parent=1 // pred_check_branch
      %23 = sbr.rel (0) target = $region9
    $region8: #{tpu_custom_call.1} parent=1 // pred_region
      %s25 = ssub.s32 128, 128
      %26 = vsyncadd [#allocation6], %s25
      %s27 = sshll.u32 [#allocation5], 4
      %s28 = int_to_ptr.vmem [resolvable:$true] %s27
      %33 = dma.hbm_to_vmem [thread:$0]  %s1, 128, %s28, [#allocation6], 64, 64, 4
    $region9: #{tpu_custom_call.1} parent=1 // pred_fallthru
      _
    // Predicated region
    $region10: #{tpu_custom_call.1} parent=1 // pred_check
      _
    $region11: #{tpu_custom_call.1} parent=1 // pred_check_branch
      %35 = sbr.rel (0) target = $region13
    $region12: #{tpu_custom_call.1} parent=1 // pred_region
      %36 = dma.done [#allocation3], 256
    $region13: #{tpu_custom_call.1} parent=1 // pred_fallthru
      _
    // Predicated region
    $region14: #{tpu_custom_call.1} parent=1 // pred_check
      _
    $region15: #{tpu_custom_call.1} parent=1 // pred_check_branch
      %38 = sbr.rel (0) target = $region17
    $region16: #{tpu_custom_call.1} parent=1 // pred_region
      %39 = dma.done [#allocation6], 128
    $region17: #{tpu_custom_call.1} parent=1 // pred_fallthru
      _
    %v41 = vld [vmem:[#allocation2] sm:$0xff]
    %v42 = vld [vmem:[#allocation2 + $0x8] sm:$0xff]
    %v43 = vpack.c.bf16 %v42, %v41
    %v44 = vld [vmem:[#allocation5] sm:$0xf]
    %v45 = vld [vmem:[#allocation5 + $0x4] sm:$0xf]
    %v48 = vunpack.c.l.b16 %v44
    %v49 = vunpack.c.l.b16 %v45
    %v50 = vpack.c.b16 %v49, %v48
    %vm52 = vcmask 130048
    %v54 = vsel %vm52, %v43, 0
    %56 = vmatprep.subr.bf16.mxu0 0
    %57 = vmatpush1.bf16.msra.mxu0 %v50
    %58 = vmatprep.subr.bf16.mxu0 0
    %59 = vmatpush1.bf16.msra.mxu0 0
    %60 = vmatprep.subr.bf16.mxu0 0
    %61 = vmatpush1.bf16.msra.mxu0 0
    %62 = vmatprep.subr.bf16.mxu0 0
    %63 = vmatpush1.bf16.msra.mxu0 0
    %64 = vmatprep.subr.bf16.mxu0 0
    %65 = vmatpush1.bf16.msra.mxu0 0
    %66 = vmatprep.subr.bf16.mxu0 0
    %67 = vmatpush1.bf16.msra.mxu0 0
    %68 = vmatprep.subr.bf16.mxu0 0
    %69 = vmatpush1.bf16.msra.mxu0 0
    %70 = vmatprep.subr.bf16.mxu0 0
    %71 = vmatpush1.bf16.msra.mxu0 0
    %72 = vmatprep.subr.bf16.mxu0 0
    %73 = vmatpush1.bf16.msra.mxu0 0
    %74 = vmatprep.subr.bf16.mxu0 0
    %75 = vmatpush1.bf16.msra.mxu0 0
    %76 = vmatprep.subr.bf16.mxu0 0
    %77 = vmatpush1.bf16.msra.mxu0 0
    %78 = vmatprep.subr.bf16.mxu0 0
    %79 = vmatpush1.bf16.msra.mxu0 0
    %80 = vmatprep.subr.bf16.mxu0 0
    %81 = vmatpush1.bf16.msra.mxu0 0
    %82 = vmatprep.subr.bf16.mxu0 0
    %83 = vmatpush1.bf16.msra.mxu0 0
    %84 = vmatprep.subr.bf16.mxu0 0
    %85 = vmatpush1.bf16.msra.mxu0 0
    %86 = vmatprep.subr.bf16.mxu0 0
    %87 = vmatpush1.bf16.msra.mxu0 0
    %88 = vmatprep.mubr.bf16.mxu0 0
    %89 = vmatmul.mubr.bf16.gmra.mrb[0].mxu0 %v54
    %v90 = vpop.f32.mrb[0].mxu0
    %v91 = vadd.f32 0.0, %v90
    %v92 = vpop.f32.mrb[0].mxu0
    %v93 = vpop.f32.mrb[0].mxu0
    %v94 = vadd.f32 0.0, %v93
    %v95 = vpop.f32.mrb[0].mxu0
    %96 = vdwg.mxu0
    %97 = vst [vmem:[#allocation7] sm:$0xff] %v91
    %98 = vst [vmem:[#allocation7 + $0x8] sm:$0xff] %v94
    // Predicated region
    $region18: #{tpu_custom_call.1} parent=1 // pred_check
      _
    $region19: #{tpu_custom_call.1} parent=1 // pred_check_branch
      %100 = sbr.rel (0) target = $region21
    $region20: #{tpu_custom_call.1} parent=1 // pred_region
      %s102 = ssub.s32 256, 128
      %103 = vsyncadd [#allocation4], %s102
      %s104 = sshll.u32 [#allocation7], 4
      %s105 = int_to_ptr.vmem [resolvable:$true] %s104
      %110 = dma.vmem_to_hbm [thread:$0]  %s105, 128, %s2, [#allocation4], 128, 128, 8
    $region21: #{tpu_custom_call.1} parent=1 // pred_fallthru
      _
    // Predicated region
    $region22: #{tpu_custom_call.1} parent=1 // pred_check
      _
    $region23: #{tpu_custom_call.1} parent=1 // pred_check_branch
      %112 = sbr.rel (0) target = $region25
    $region24: #{tpu_custom_call.1} parent=1 // pred_region
      %113 = dma.done [#allocation4], 256
    $region25: #{tpu_custom_call.1} parent=1 // pred_fallthru
      _
    %114 = vsyncpa [#allocation3], 1
    %115 = vsyncpa [#allocation6], 1
    %116 = vsyncpa [#allocation4], 1

</llo_original>
